<compile_context>
chip_gen: v7x
topology: tpu7x:2x2x1
jax: 0.10.0
libtpu: 0.0.40
codegen_flags: <defaults>
</compile_context>

<pallas_src>
import functools

import jax
import jax.numpy as jnp
from jax import lax
from jax.experimental import pallas as pl
from jax.experimental.pallas import tpu as pltpu

_LANE = 128


def _round_down(v, m):
    return max(m, (v // m) * m)


def _tpu_hw():
    """(physical VMEM bytes per core, tensorcores per chip) with safe fallbacks."""
    vmem_cap = 64 << 20  # conservative default (v7x per-TC)
    cores = 1
    info = None
    try:
        info = pltpu.get_tpu_info()
        vmem_cap = int(getattr(info, "vmem_capacity_bytes", vmem_cap))
    except Exception:
        pass
    try:
        cores = int(getattr(info, "num_cores", 1)) if info is not None else 1
    except Exception:
        cores = 1
    return vmem_cap, cores


def _vmem_limit(need_bytes, vmem_cap):
    """Explicit scoped-VMEM limit: generous headroom, capped by the chip."""
    hi = max(24 << 20, (vmem_cap * 3) // 4)      # ~48 MiB on v7x, ~96 MiB on v5e/v6e
    want = max(32 << 20, need_bytes * 3 // 2 + (1 << 20))
    return int(min(want, hi))


# --------------------------------------------------------------------------
# Kernels
# --------------------------------------------------------------------------

def _abs_mean_smallr_kernel(x_ref, o_ref, *, r, inner, inv_count):
    """Small-R fast path on a (tb, R*inner) block: pure VPU adds of R slices."""
    acc = jnp.abs(x_ref[:, 0:inner].astype(jnp.float32))
    for k in range(1, r):
        acc = acc + jnp.abs(x_ref[:, k * inner:(k + 1) * inner].astype(jnp.float32))
    o_ref[...] = (acc * inv_count).astype(o_ref.dtype)


def _abs_mean_mid_single_kernel(x_ref, o_ref, *, inv_count):
    """Reduce the middle axis of a (tb, R, ti) block; single reduce step."""
    x = x_ref[...].astype(jnp.float32)
    o_ref[...] = (jnp.sum(jnp.abs(x), axis=1) * inv_count).astype(o_ref.dtype)


def _abs_mean_mid_kernel(x_ref, o_ref, acc_ref, *, inv_count, r_total, mask_tail):
    """Reduce middle axis of (tb, tr, ti) blocks, accumulating over grid axis 2."""
    k = pl.program_id(2)

    @pl.when(k == 0)
    def _():
        acc_ref[...] = jnp.zeros_like(acc_ref)

    x = x_ref[...].astype(jnp.float32)
    ax = jnp.abs(x)
    if mask_tail:
        row = k * x.shape[1] + lax.broadcasted_iota(jnp.int32, x.shape, 1)
        ax = jnp.where(row < r_total, ax, 0.0)
    acc_ref[...] += jnp.sum(ax, axis=1)

    @pl.when(k == pl.num_programs(2) - 1)
    def _():
        o_ref[...] = (acc_ref[...] * inv_count).astype(o_ref.dtype)


def _abs_mean_last_single_kernel(x_ref, o_ref, *, inv_count):
    """Reduce the last axis of a (to, R) block -> (to, 1); single reduce step."""
    x = x_ref[...].astype(jnp.float32)
    o_ref[...] = (
        jnp.sum(jnp.abs(x), axis=-1, keepdims=True) * inv_count
    ).astype(o_ref.dtype)


def _abs_mean_last_kernel(x_ref, o_ref, acc_ref, *, inv_count, r_total, mask_tail):
    """Reduce last axis of (to, tr) blocks, accumulating over grid axis 1."""
    k = pl.program_id(1)

    @pl.when(k == 0)
    def _():
        acc_ref[...] = jnp.zeros_like(acc_ref)

    x = x_ref[...].astype(jnp.float32)
    ax = jnp.abs(x)
    if mask_tail:
        col = k * x.shape[1] + lax.broadcasted_iota(jnp.int32, x.shape, 1)
        ax = jnp.where(col < r_total, ax, 0.0)
    acc_ref[...] += jnp.sum(ax, axis=-1, keepdims=True)

    @pl.when(k == pl.num_programs(1) - 1)
    def _():
        o_ref[...] = (acc_ref[...] * inv_count).astype(o_ref.dtype)


# --------------------------------------------------------------------------
# Tile selection
# --------------------------------------------------------------------------

def _choose_mid_tiles(outer, r, inner, itemsize, sub, budget):
    """Block sizing for the (outer, R, inner) layout against a byte budget."""
    tb_min = min(outer, sub)
    tr_min = min(r, sub)

    # Lane tile: full inner if it fits (or is tiny), else a multiple of 128.
    max_ti = max(1, budget // (itemsize * tb_min * tr_min))
    if inner <= max_ti or inner <= _LANE:
        ti = inner
    else:
        ti = _round_down(min(inner, max_ti), _LANE)

    # Reduce tile: full R if it fits (or <= one sublane group), else an
    # arbitrary multiple of `sub`; any tail is masked in-kernel.
    max_tr = max(1, budget // (itemsize * tb_min * ti))
    if r <= max_tr or r <= sub:
        tr = r
    else:
        tr = _round_down(min(r, max_tr), sub)

    # Outer tile soaks up the remaining budget.
    max_tb = max(1, budget // (itemsize * tr * ti))
    tb = outer if outer <= sub else min(outer, max(sub, _round_down(max_tb, sub)))
    return tb, tr, ti


def _choose_last_tiles(outer, r, itemsize, sub, budget):
    """Block sizing for the (outer, R) last-axis layout."""
    to_min = min(outer, sub)
    max_tr = max(1, budget // (itemsize * to_min))
    if r <= max_tr or r <= _LANE:
        tr = r
    else:
        tr = _round_down(min(r, max_tr), _LANE)
    max_to = max(1, budget // (itemsize * tr))
    to = outer if outer <= sub else min(outer, max(sub, _round_down(max_to, sub)))
    return to, tr


# --------------------------------------------------------------------------
# Wrapper
# --------------------------------------------------------------------------

def norm_reducer(x, dim, _block_budget=None):
    """Pallas equivalent of NormReducer(dim).forward(x) == x.abs().mean(dim).

    `_block_budget` (bytes of input per block) is a test knob to force tiling
    of the reduce axis at small shapes; leave None in normal use.
    """
    rank = x.ndim
    dim = dim % rank
    out_shape = x.shape[:dim] + x.shape[dim + 1:]
    out_dtype = x.dtype
    # TODO(synk): integer inputs diverge from torch (torch.mean errors on ints);
    # here the mean is computed in f32 and cast back to the input dtype.

    outer = 1
    for s in x.shape[:dim]:
        outer *= s
    r = x.shape[dim]
    inner = 1
    for s in x.shape[dim + 1:]:
        inner *= s

    itemsize = x.dtype.itemsize
    inv_count = 1.0 / float(r)
    sub = max(8, 32 // itemsize)  # sublane packing: f32->8, bf16->16, int8->32

    vmem_cap, cores = _tpu_hw()
    # Per-block input budget: 4 MiB on 64 MiB-VMEM parts (v7x), 8 MiB otherwise.
    budget = (4 << 20) if vmem_cap < (96 << 20) else (8 << 20)
    if _block_budget is not None:
        budget = int(_block_budget)
    # Multi-TC heuristic: explicit core count, or a 64 MiB-class part (v7x).
    multi_core = cores > 1 or vmem_cap < (96 << 20)

    if inner > 1:
        # ---------- small-R fast path: (outer, R*inner) lane-packed view ----------
        if (inner % _LANE == 0 and r <= sub
                and min(outer, sub) * r * inner * itemsize <= budget):
            x2 = x.reshape(outer, r * inner)
            max_tb = max(1, budget // (itemsize * r * inner))
            tb = outer if outer <= sub else min(
                outer, max(sub, _round_down(max_tb, sub)))
            if multi_core and pl.cdiv(outer, tb) == 1 and tb >= 2 * sub:
                tb = _round_down(tb // 2, sub)  # give the 2nd TensorCore a block
            nb = pl.cdiv(outer, tb)

            need = 2 * tb * r * inner * itemsize + 2 * tb * inner * itemsize
            kernel = functools.partial(
                _abs_mean_smallr_kernel, r=r, inner=inner, inv_count=inv_count)
            y = pl.pallas_call(
                kernel,
                out_shape=jax.ShapeDtypeStruct((outer, inner), out_dtype),
                grid_spec=pltpu.PrefetchScalarGridSpec(
                    num_scalar_prefetch=0,
                    grid=(nb,),
                    in_specs=[pl.BlockSpec((tb, r * inner), lambda b: (b, 0))],
                    out_specs=pl.BlockSpec((tb, inner), lambda b: (b, 0)),
                ),
                compiler_params=pltpu.CompilerParams(
                    dimension_semantics=("parallel",),
                    vmem_limit_bytes=_vmem_limit(need, vmem_cap),
                ),
            )(x2)
            return y.reshape(out_shape)

        # ---------- general path: reduce middle axis of (outer, R, inner) ----------
        x3 = x.reshape(outer, r, inner)
        tb, tr, ti = _choose_mid_tiles(outer, r, inner, itemsize, sub, budget)
        nb, ni = pl.cdiv(outer, tb), pl.cdiv(inner, ti)
        nr = pl.cdiv(r, tr)
        if multi_core and nb * ni == 1 and nr > 1:
            # Make sure a split lands on a PARALLEL axis so both TCs run.
            if ti >= 2 * _LANE:
                ti = _round_down(ti // 2, _LANE)
                ni = pl.cdiv(inner, ti)
            elif tb >= 2 * sub:
                tb = _round_down(tb // 2, sub)
                nb = pl.cdiv(outer, tb)
        mask_tail = (nr > 1) and (r % tr != 0)

        need = 2 * tb * tr * ti * itemsize + 2 * tb * ti * itemsize
        if nr > 1:
            need += tb * ti * 4
        vmem_limit = _vmem_limit(need, vmem_cap)

        if nr == 1:
            # Single reduce step: no accumulator scratch, no pl.when branches.
            kernel = functools.partial(
                _abs_mean_mid_single_kernel, inv_count=inv_count)
            y = pl.pallas_call(
                kernel,
                out_shape=jax.ShapeDtypeStruct((outer, inner), out_dtype),
                grid_spec=pltpu.PrefetchScalarGridSpec(
                    num_scalar_prefetch=0,
                    grid=(nb, ni),
                    in_specs=[pl.BlockSpec((tb, r, ti), lambda b, i: (b, 0, i))],
                    out_specs=pl.BlockSpec((tb, ti), lambda b, i: (b, i)),
                ),
                compiler_params=pltpu.CompilerParams(
                    dimension_semantics=("parallel", "parallel"),
                    vmem_limit_bytes=vmem_limit,
                ),
            )(x3)
        else:
            kernel = functools.partial(
                _abs_mean_mid_kernel, inv_count=inv_count,
                r_total=r, mask_tail=mask_tail)
            y = pl.pallas_call(
                kernel,
                out_shape=jax.ShapeDtypeStruct((outer, inner), out_dtype),
                grid_spec=pltpu.PrefetchScalarGridSpec(
                    num_scalar_prefetch=0,
                    grid=(nb, ni, nr),
                    in_specs=[pl.BlockSpec((tb, tr, ti),
                                           lambda b, i, k: (b, k, i))],
                    out_specs=pl.BlockSpec((tb, ti), lambda b, i, k: (b, i)),
                    scratch_shapes=[pltpu.VMEM((tb, ti), jnp.float32)],
                ),
                compiler_params=pltpu.CompilerParams(
                    dimension_semantics=("parallel", "parallel", "arbitrary"),
                    vmem_limit_bytes=vmem_limit,
                ),
            )(x3)
        return y.reshape(out_shape)

    # ---------- last-axis path (inner == 1), incl. rank-1 -> scalar ----------
    x2 = x.reshape(outer, r)
    to, tr = _choose_last_tiles(outer, r, itemsize, sub, budget)
    nb, nr = pl.cdiv(outer, to), pl.cdiv(r, tr)
    mask_tail = (nr > 1) and (r % tr != 0)

    need = 2 * to * tr * itemsize + 2 * to * itemsize + (to * 4 if nr > 1 else 0)
    vmem_limit = _vmem_limit(need, vmem_cap)

    if nr == 1:
        kernel = functools.partial(_abs_mean_last_single_kernel, inv_count=inv_count)
        y = pl.pallas_call(
            kernel,
            out_shape=jax.ShapeDtypeStruct((outer, 1), out_dtype),
            grid_spec=pltpu.PrefetchScalarGridSpec(
                num_scalar_prefetch=0,
                grid=(nb,),
                in_specs=[pl.BlockSpec((to, r), lambda b: (b, 0))],
                out_specs=pl.BlockSpec((to, 1), lambda b: (b, 0)),
            ),
            compiler_params=pltpu.CompilerParams(
                dimension_semantics=("parallel",),
                vmem_limit_bytes=vmem_limit,
            ),
        )(x2)
    else:
        kernel = functools.partial(
            _abs_mean_last_kernel, inv_count=inv_count,
            r_total=r, mask_tail=mask_tail)
        y = pl.pallas_call(
            kernel,
            out_shape=jax.ShapeDtypeStruct((outer, 1), out_dtype),
            grid_spec=pltpu.PrefetchScalarGridSpec(
                num_scalar_prefetch=0,
                grid=(nb, nr),
                in_specs=[pl.BlockSpec((to, tr), lambda b, k: (b, k))],
                out_specs=pl.BlockSpec((to, 1), lambda b, k: (b, 0)),
                scratch_shapes=[pltpu.VMEM((to, 1), jnp.float32)],
            ),
            compiler_params=pltpu.CompilerParams(
                dimension_semantics=("parallel", "arbitrary"),
                vmem_limit_bytes=vmem_limit,
            ),
        )(x2)
    return y.reshape(out_shape)


if __name__ == "__main__":
    root = jax.random.PRNGKey(0)
    k0, k1, k2, k3, k4, k5 = jax.random.split(root, 6)

    # Primary case: NCHW input, reduce over channels (dim=1) -> small-R fast path.
    x = jax.random.normal(k0, (2, 4, 16, 16), dtype=jnp.float32)
    out = jax.block_until_ready(norm_reducer(x, 1))
    ref = jnp.mean(jnp.abs(x), axis=1)
    assert out.shape == ref.shape and out.dtype == ref.dtype
    assert jnp.allclose(out, ref, atol=1e-6, rtol=1e-6)

    # Leading-axis reduction (dim=0) -> fast path with outer == 1.
    out0 = jax.block_until_ready(norm_reducer(x, 0))
    ref0 = jnp.mean(jnp.abs(x), axis=0)
    assert out0.shape == ref0.shape
    assert jnp.allclose(out0, ref0, atol=1e-6, rtol=1e-6)

    # Last-axis reduction (inner == 1 path, single reduce step).
    outl = jax.block_until_ready(norm_reducer(x, -1))
    refl = jnp.mean(jnp.abs(x), axis=-1)
    assert outl.shape == refl.shape
    assert jnp.allclose(outl, refl, atol=1e-6, rtol=1e-6)

    # Rank-1 -> scalar output.
    v = jax.random.normal(k1, (8,), dtype=jnp.float32)
    outs = jax.block_until_ready(norm_reducer(v, 0))
    refs = jnp.mean(jnp.abs(v))
    assert outs.shape == refs.shape
    assert jnp.allclose(outs, refs, atol=1e-6, rtol=1e-6)

    # Larger shape on the general middle-axis path.
    xb = jax.random.normal(k2, (8, 64, 32, 128), dtype=jnp.float32)
    outb = jax.block_until_ready(norm_reducer(xb, 1))
    refb = jnp.mean(jnp.abs(xb), axis=1)
    assert outb.shape == refb.shape
    assert jnp.allclose(outb, refb, atol=1e-5, rtol=1e-5)

    # Force multi-step reduce + tail masking on the middle-axis path
    # (tiny per-block budget so R=50 is split into tr=16 tiles).
    xm = jax.random.normal(k3, (4, 50, 8, 32), dtype=jnp.float32)
    outm = jax.block_until_ready(norm_reducer(xm, 1, _block_budget=64 * 1024))
    refm = jnp.mean(jnp.abs(xm), axis=1)
    assert outm.shape == refm.shape
    assert jnp.allclose(outm, refm, atol=1e-5, rtol=1e-5)

    # Force tiled reduce + tail masking on the last-axis path.
    xl = jax.random.normal(k4, (16, 300), dtype=jnp.float32)
    outt = jax.block_until_ready(norm_reducer(xl, 1, _block_budget=8 * 1024))
    reft = jnp.mean(jnp.abs(xl), axis=1)
    assert outt.shape == reft.shape
    assert jnp.allclose(outt, reft, atol=1e-5, rtol=1e-5)

    # bf16 input through the fast path (f32 accumulation, cast back).
    xbf = jax.random.normal(k5, (2, 4, 16, 16), dtype=jnp.float32).astype(jnp.bfloat16)
    outbf = jax.block_until_ready(norm_reducer(xbf, 1))
    refbf = jnp.mean(jnp.abs(xbf.astype(jnp.float32)), axis=1).astype(jnp.bfloat16)
    assert outbf.shape == refbf.shape and outbf.dtype == jnp.bfloat16
    assert jnp.allclose(outbf.astype(jnp.float32), refbf.astype(jnp.float32),
                        atol=2e-2, rtol=2e-2)

    print("KERNEL_OK")
</pallas_src>

<mosaic_0001>
module attributes {stable_mosaic.version = 11 : i64} {
  func.func @_abs_mean_smallr_kernel(%arg0: i32, %arg1: memref<2x1024xf32, #tpu.memory_space<vmem>>, %arg2: memref<2x256xf32, #tpu.memory_space<vmem>>) attributes {dimension_semantics = [#tpu.dimension_semantics<parallel>], iteration_bounds = array<i64: 1>, scalar_prefetch = 0 : i64, scratch_operands = 0 : i64, tpu.core_type = #tpu.core_type<tc>, window_params = [{transform_indices = @transform_0, window_bounds = array<i64: 2, 1024>}, {transform_indices = @transform_1, window_bounds = array<i64: 2, 256>}]} {
    %c0 = arith.constant 0 : index
    %c0_0 = arith.constant 0 : index
    %0 = vector.load %arg1[%c0, %c0_0] : memref<2x1024xf32, #tpu.memory_space<vmem>>, vector<2x256xf32>
    %1 = math.absf %0 : vector<2x256xf32>
    %c0_1 = arith.constant 0 : index
    %c256 = arith.constant 256 : index
    %2 = vector.load %arg1[%c0_1, %c256] : memref<2x1024xf32, #tpu.memory_space<vmem>>, vector<2x256xf32>
    %3 = math.absf %2 : vector<2x256xf32>
    %4 = arith.addf %1, %3 : vector<2x256xf32>
    %c0_2 = arith.constant 0 : index
    %c512 = arith.constant 512 : index
    %5 = vector.load %arg1[%c0_2, %c512] : memref<2x1024xf32, #tpu.memory_space<vmem>>, vector<2x256xf32>
    %6 = math.absf %5 : vector<2x256xf32>
    %7 = arith.addf %4, %6 : vector<2x256xf32>
    %c0_3 = arith.constant 0 : index
    %c768 = arith.constant 768 : index
    %8 = vector.load %arg1[%c0_3, %c768] : memref<2x1024xf32, #tpu.memory_space<vmem>>, vector<2x256xf32>
    %9 = math.absf %8 : vector<2x256xf32>
    %10 = arith.addf %7, %9 : vector<2x256xf32>
    %cst = arith.constant 2.500000e-01 : f32
    %11 = vector.broadcast %cst : f32 to vector<2x256xf32>
    %12 = arith.mulf %10, %11 : vector<2x256xf32>
    %c0_4 = arith.constant 0 : index
    %c0_5 = arith.constant 0 : index
    %13 = vector.load %arg2[%c0_4, %c0_5] : memref<2x256xf32, #tpu.memory_space<vmem>>, vector<2x256xf32>
    tpu.vector_store %arg2[%c0_4, %c0_5], %12 {strides = array<i32>} : memref<2x256xf32, #tpu.memory_space<vmem>>, vector<2x256xf32>,
    return
  }
  func.func @transform_0(%arg0: i32) -> (i32, i32) {
    %c0_i32 = arith.constant 0 : i32
    %c0_i32_0 = arith.constant 0 : i32
    return %arg0, %c0_i32 : i32, i32
  }
  func.func @transform_1(%arg0: i32) -> (i32, i32) {
    %c0_i32 = arith.constant 0 : i32
    %c0_i32_0 = arith.constant 0 : i32
    return %arg0, %c0_i32 : i32, i32
  }
}

</mosaic_0001>

<llo_original>
// kernel: tpu_custom_call.1
$region0: #{tpu_custom_call.1}
  #allocation0 [shape = 'u32[]', space=smem, size = 0x4, offset = 0x4, fixed_abs, tag = 'smem constant byte address 0x4 - core index']
  #allocation1 [shape = 'u32[144,128]{1,0:T(1,128)}', space=vmem, size = 0x12000, scoped, tag = 'internal scratch']
  %s0 = inlined_call_operand.hbm [shape: f32[2,1024], index: 0, kind: input, shape index: {}]
  %s1 = inlined_call_operand.hbm [shape: f32[2,256], index: 1, kind: output, shape index: {}]
  %s2 = sld [smem:[#allocation0]]
  $region18: #{tpu_custom_call.1} parent=0
    _
  %s4 = ssub.s32 1, %s2
  %s5 = scalar_select 0, %s4, %s2
  $region1: #{tpu_custom_call.1} parent=0
    #allocation2 [shape = 'u8[8192]{0}', space=vmem, size = 0x2000, scoped, tag = 'input window, operand 0, single buffered']
    #allocation3 [shape = 's32[1]{0}', space=sflag, size = 0x4, scoped, tag = 'scoped memory for tpu_custom_call.1']
    #allocation4 [shape = 's32[1]{0}', space=sflag, size = 0x4, scoped, tag = 'scoped memory for tpu_custom_call.1']
    #allocation5 [shape = 'u8[2048]{0}', space=vmem, size = 0x800, scoped, tag = 'output window, operand 0, single buffered']
    %6 = vsyncpa [#allocation3], 0
    %7 = vsyncpa [#allocation4], 0
    // Predicated region
    $region2: #{tpu_custom_call.1} parent=1 // pred_check
      _
    $region3: #{tpu_custom_call.1} parent=1 // pred_check_branch
      %9 = sbr.rel (0) target = $region5
    $region4: #{tpu_custom_call.1} parent=1 // pred_region
      %s11 = ssub.s32 256, 256
      %12 = vsyncadd [#allocation3], %s11
      %s14 = sshll.u32 [#allocation2], 4
      %s15 = int_to_ptr.vmem [resolvable:$true] %s14
      %17 = dma.hbm_to_vmem [thread:$0]  %s0, 256, %s15, [#allocation3]
    $region5: #{tpu_custom_call.1} parent=1 // pred_fallthru
      _
    // Predicated region
    $region6: #{tpu_custom_call.1} parent=1 // pred_check
      _
    $region7: #{tpu_custom_call.1} parent=1 // pred_check_branch
      %19 = sbr.rel (0) target = $region9
    $region8: #{tpu_custom_call.1} parent=1 // pred_region
      %20 = dma.done [#allocation3], 256
    $region9: #{tpu_custom_call.1} parent=1 // pred_fallthru
      _
    %v21 = vld [vmem:[#allocation2] sm:$0xf]
    %v22 = vand.u32 2147483647, %v21
    %v23 = vld [vmem:[#allocation2 + $0x4] sm:$0xf]
    %v24 = vand.u32 2147483647, %v23
    %v25 = vadd.f32 %v22, %v24
    %v26 = vld [vmem:[#allocation2 + $0x8] sm:$0xf]
    %v27 = vand.u32 2147483647, %v26
    %v28 = vadd.f32 %v25, %v27
    %v29 = vld [vmem:[#allocation2 + $0xc] sm:$0xf]
    %v30 = vand.u32 2147483647, %v29
    %v31 = vadd.f32 %v28, %v30
    %v32 = vmul.f32 %v31, 0.25
    %33 = vst [vmem:[#allocation5] sm:$0xf] %v32
    // Predicated region
    $region10: #{tpu_custom_call.1} parent=1 // pred_check
      _
    $region11: #{tpu_custom_call.1} parent=1 // pred_check_branch
      %35 = sbr.rel (0) target = $region13
    $region12: #{tpu_custom_call.1} parent=1 // pred_region
      %s37 = ssub.s32 64, 64
      %38 = vsyncadd [#allocation4], %s37
      %s40 = sshll.u32 [#allocation5], 4
      %s41 = int_to_ptr.vmem [resolvable:$true] %s40
      %43 = dma.vmem_to_hbm [thread:$0]  %s41, 64, %s1, [#allocation4]
    $region13: #{tpu_custom_call.1} parent=1 // pred_fallthru
      _
    // Predicated region
    $region14: #{tpu_custom_call.1} parent=1 // pred_check
      _
    $region15: #{tpu_custom_call.1} parent=1 // pred_check_branch
      %45 = sbr.rel (0) target = $region17
    $region16: #{tpu_custom_call.1} parent=1 // pred_region
      %46 = dma.done [#allocation4], 64
    $region17: #{tpu_custom_call.1} parent=1 // pred_fallthru
      _
    %47 = vsyncpa [#allocation3], 1
    %48 = vsyncpa [#allocation4], 1

</llo_original>
